<compile_context>
chip_gen: v5e
topology: v5e:2x2
jax: 0.10.0
libtpu: 0.0.40
codegen_flags: <defaults>
</compile_context>

<pallas_src>
import functools
import math

import jax
import jax.numpy as jnp
from jax.experimental import pallas as pl
from jax.experimental.pallas import tpu as pltpu


NEG_SLOPE = 0.01   # nn.LeakyReLU default negative_slope
LANE = 128         # TPU lane width  -> feature dims padded to this
SUBLANE = 8        # TPU sublane     -> batch padded to this


def _round_up(x, m):
    return (x + m - 1) // m * m


# --------------------------------------------------------------------------
# Fused kernel: x plus every (W, b) is resident in VMEM; the whole MLP runs
# per batch tile with activations kept as values (never touching HBM).
# --------------------------------------------------------------------------
def _fused_mlp_kernel(*refs, relu_flags):
    x_ref, o_ref = refs[0], refs[-1]
    layer_refs = refs[1:-1]

    h = x_ref[...]                                   # (TM, Din_p), bf16
    for li, relu_after in enumerate(relu_flags):     # static Python loop
        w_ref = layer_refs[2 * li]
        b_ref = layer_refs[2 * li + 1]
        y = jnp.dot(h.astype(w_ref.dtype), w_ref[...],
                    preferred_element_type=jnp.float32)   # MXU, f32 acc
        y = y + b_ref[...]                                 # (1, Dout_p) b-cast
        if relu_after:
            y = jnp.where(y > 0, y, NEG_SLOPE * y)         # LeakyReLU in f32
        h = y
    o_ref[...] = h.astype(o_ref.dtype)


# --------------------------------------------------------------------------
# Parameter init mirroring the PyTorch module
#   - layers followed by LeakyReLU: xavier_uniform with leaky_relu gain
#   - final layer (last_relu=False): PyTorch default Linear init
#   - biases: U(-1/sqrt(fan_in), 1/sqrt(fan_in))
# Padded, bf16 copies are prepared for the kernel; padded entries are zero.
# --------------------------------------------------------------------------
def init_mlp_params(key, input_layer_size, hidden_layers, last_relu=False,
                    param_dtype=jnp.bfloat16):
    gain = math.sqrt(2.0 / (1.0 + NEG_SLOPE ** 2))
    sizes = [input_layer_size] + list(hidden_layers)
    n_layers = len(sizes) - 1

    weights, biases, relu_flags = [], [], []
    for li in range(n_layers):
        fan_in, fan_out = sizes[li], sizes[li + 1]
        key, kw, kb = jax.random.split(key, 3)
        is_last = li == n_layers - 1
        relu_after = (not is_last) or last_relu
        if relu_after:
            bound_w = gain * math.sqrt(6.0 / (fan_in + fan_out))
        else:
            bound_w = 1.0 / math.sqrt(fan_in)
        w = jax.random.uniform(kw, (fan_in, fan_out), jnp.float32,
                               minval=-bound_w, maxval=bound_w)
        bound_b = 1.0 / math.sqrt(fan_in)
        b = jax.random.uniform(kb, (1, fan_out), jnp.float32,
                               minval=-bound_b, maxval=bound_b)
        weights.append(w)
        biases.append(b)
        relu_flags.append(relu_after)

    padded_w, padded_b = [], []
    for w, b in zip(weights, biases):
        fi, fo = w.shape
        fi_p, fo_p = _round_up(fi, LANE), _round_up(fo, LANE)
        wp = jnp.zeros((fi_p, fo_p), param_dtype)
        wp = wp.at[:fi, :fo].set(w.astype(param_dtype))
        bp = jnp.zeros((1, fo_p), jnp.float32)
        bp = bp.at[:, :fo].set(b)                    # bias stays f32
        padded_w.append(wp)
        padded_b.append(bp)

    return {
        "weights": weights,            # unpadded f32 (reference / export)
        "biases": biases,
        "padded_weights": padded_w,    # kernel operands (bf16, lane-padded)
        "padded_biases": padded_b,
        "relu_flags": tuple(relu_flags),
        "sizes": tuple(sizes),
        "param_dtype": param_dtype,
    }


# --------------------------------------------------------------------------
# Wrapper: pad x, run the single fused pallas_call, slice the padding off.
# --------------------------------------------------------------------------
def mlp_forward(x, params, *, tile_m=128):
    B, Din = x.shape
    sizes = params["sizes"]
    assert Din == sizes[0], "input feature size mismatch"
    pdtype = params["param_dtype"]

    Din_p = _round_up(Din, LANE)
    Dout = sizes[-1]
    Dout_p = _round_up(Dout, LANE)

    # Batch tiling: small batches -> one tile; large batches -> 128-row tiles
    # over a "parallel" grid axis (megacore sharding on v7x).
    B_p = _round_up(B, SUBLANE)
    if B_p > tile_m:
        tm = tile_m
        B_p = _round_up(B_p, tm)
    else:
        tm = B_p

    x_p = jnp.zeros((B_p, Din_p), pdtype).at[:B, :Din].set(x.astype(pdtype))

    in_specs = [pl.BlockSpec((tm, Din_p), lambda i: (i, 0))]
    flat_params = []
    for wp, bp in zip(params["padded_weights"], params["padded_biases"]):
        # Whole-array blocks (block == full dims, so no (8,128) constraint);
        # constant index_map -> weights stay resident across batch tiles.
        in_specs.append(pl.BlockSpec(wp.shape, lambda i: (0, 0)))
        in_specs.append(pl.BlockSpec(bp.shape, lambda i: (0, 0)))
        flat_params.extend([wp, bp])

    kernel = functools.partial(_fused_mlp_kernel,
                               relu_flags=params["relu_flags"])

    out_p = pl.pallas_call(
        kernel,
        out_shape=jax.ShapeDtypeStruct((B_p, Dout_p), jnp.float32),
        grid=(B_p // tm,),
        in_specs=in_specs,
        out_specs=pl.BlockSpec((tm, Dout_p), lambda i: (i, 0)),
        compiler_params=pltpu.CompilerParams(
            dimension_semantics=("parallel",),
        ),
    )(x_p, *flat_params)

    return out_p[:B, :Dout]


if __name__ == "__main__":
    key = jax.random.PRNGKey(0)
    k_in, k_params = jax.random.split(key)

    batch = 256
    input_layer_size = 32
    hidden_layers = [64, 32, 16]
    last_relu = False

    x = jax.random.normal(k_in, (batch, input_layer_size), jnp.float32)
    params = init_mlp_params(k_params, input_layer_size, hidden_layers,
                             last_relu=last_relu)

    out = mlp_forward(x, params)
    jax.block_until_ready(out)

    # Plain-JAX reference following the exact same numeric path
    # (bf16 inputs to each matmul, f32 accumulation, f32 bias + LeakyReLU).
    pdtype = params["param_dtype"]
    ref = x
    for w, b, relu_after in zip(params["weights"], params["biases"],
                                params["relu_flags"]):
        ref = jnp.dot(ref.astype(pdtype), w.astype(pdtype),
                      preferred_element_type=jnp.float32) + b
        if relu_after:
            ref = jnp.where(ref > 0, ref, NEG_SLOPE * ref)

    assert out.shape == (batch, hidden_layers[-1])
    assert jnp.allclose(out, ref, atol=1e-3, rtol=1e-3), (
        float(jnp.max(jnp.abs(out - ref))))

    print("KERNEL_OK")
</pallas_src>

<mosaic_0001>
module attributes {stable_mosaic.version = 11 : i64} {
  func.func @_fused_mlp_kernel(%arg0: i32, %arg1: memref<128x128xbf16, #tpu.memory_space<vmem>>, %arg2: memref<128x128xbf16, #tpu.memory_space<vmem>>, %arg3: memref<1x128xf32, #tpu.memory_space<vmem>>, %arg4: memref<128x128xbf16, #tpu.memory_space<vmem>>, %arg5: memref<1x128xf32, #tpu.memory_space<vmem>>, %arg6: memref<128x128xbf16, #tpu.memory_space<vmem>>, %arg7: memref<1x128xf32, #tpu.memory_space<vmem>>, %arg8: memref<128x128xf32, #tpu.memory_space<vmem>>) attributes {dimension_semantics = [#tpu.dimension_semantics<parallel>], iteration_bounds = array<i64: 2>, scalar_prefetch = 0 : i64, scratch_operands = 0 : i64, tpu.core_type = #tpu.core_type<tc>, window_params = [{transform_indices = @transform_0, window_bounds = array<i64: 128, 128>}, {pipeline_mode = #tpu.pipeline_mode<synchronous>, transform_indices = @transform_1, window_bounds = array<i64: 128, 128>}, {pipeline_mode = #tpu.pipeline_mode<synchronous>, transform_indices = @transform_2, window_bounds = array<i64: 1, 128>}, {pipeline_mode = #tpu.pipeline_mode<synchronous>, transform_indices = @transform_3, window_bounds = array<i64: 128, 128>}, {pipeline_mode = #tpu.pipeline_mode<synchronous>, transform_indices = @transform_4, window_bounds = array<i64: 1, 128>}, {pipeline_mode = #tpu.pipeline_mode<synchronous>, transform_indices = @transform_5, window_bounds = array<i64: 128, 128>}, {pipeline_mode = #tpu.pipeline_mode<synchronous>, transform_indices = @transform_6, window_bounds = array<i64: 1, 128>}, {transform_indices = @transform_7, window_bounds = array<i64: 128, 128>}]} {
    %c0 = arith.constant 0 : index
    %c0_0 = arith.constant 0 : index
    %0 = vector.load %arg1[%c0, %c0_0] : memref<128x128xbf16, #tpu.memory_space<vmem>>, vector<128x128xbf16>
    %c0_1 = arith.constant 0 : index
    %c0_2 = arith.constant 0 : index
    %1 = vector.load %arg2[%c0_1, %c0_2] : memref<128x128xbf16, #tpu.memory_space<vmem>>, vector<128x128xbf16>
    %cst = arith.constant dense<0.000000e+00> : vector<128x128xf32>
    %2 = tpu.matmul %0, %1, %cst {dimension_numbers = #tpu.dot_dimension_numbers<[1], [0], [0], [1], [0, 0, 1, 1], [], []>} : vector<128x128xbf16>, vector<128x128xbf16>, vector<128x128xf32> -> vector<128x128xf32>
    %c0_3 = arith.constant 0 : index
    %c0_4 = arith.constant 0 : index
    %3 = vector.load %arg3[%c0_3, %c0_4] : memref<1x128xf32, #tpu.memory_space<vmem>>, vector<1x128xf32>
    %4 = vector.broadcast %3 : vector<1x128xf32> to vector<128x128xf32>
    %5 = arith.addf %2, %4 : vector<128x128xf32>
    %cst_5 = arith.constant 0.000000e+00 : f32
    %6 = vector.broadcast %cst_5 : f32 to vector<128x128xf32>
    %7 = arith.cmpf ogt, %5, %6 : vector<128x128xf32>
    %cst_6 = arith.constant 0.00999999977 : f32
    %8 = vector.broadcast %cst_6 : f32 to vector<128x128xf32>
    %9 = arith.mulf %8, %5 : vector<128x128xf32>
    %10 = arith.select %7, %5, %9 : vector<128x128xi1>, vector<128x128xf32>
    %11 = arith.truncf %10 : vector<128x128xf32> to vector<128x128xbf16>
    %c0_7 = arith.constant 0 : index
    %c0_8 = arith.constant 0 : index
    %12 = vector.load %arg4[%c0_7, %c0_8] : memref<128x128xbf16, #tpu.memory_space<vmem>>, vector<128x128xbf16>
    %cst_9 = arith.constant dense<0.000000e+00> : vector<128x128xf32>
    %13 = tpu.matmul %11, %12, %cst_9 {dimension_numbers = #tpu.dot_dimension_numbers<[1], [0], [0], [1], [0, 0, 1, 1], [], []>} : vector<128x128xbf16>, vector<128x128xbf16>, vector<128x128xf32> -> vector<128x128xf32>
    %c0_10 = arith.constant 0 : index
    %c0_11 = arith.constant 0 : index
    %14 = vector.load %arg5[%c0_10, %c0_11] : memref<1x128xf32, #tpu.memory_space<vmem>>, vector<1x128xf32>
    %15 = vector.broadcast %14 : vector<1x128xf32> to vector<128x128xf32>
    %16 = arith.addf %13, %15 : vector<128x128xf32>
    %cst_12 = arith.constant 0.000000e+00 : f32
    %17 = vector.broadcast %cst_12 : f32 to vector<128x128xf32>
    %18 = arith.cmpf ogt, %16, %17 : vector<128x128xf32>
    %cst_13 = arith.constant 0.00999999977 : f32
    %19 = vector.broadcast %cst_13 : f32 to vector<128x128xf32>
    %20 = arith.mulf %19, %16 : vector<128x128xf32>
    %21 = arith.select %18, %16, %20 : vector<128x128xi1>, vector<128x128xf32>
    %22 = arith.truncf %21 : vector<128x128xf32> to vector<128x128xbf16>
    %c0_14 = arith.constant 0 : index
    %c0_15 = arith.constant 0 : index
    %23 = vector.load %arg6[%c0_14, %c0_15] : memref<128x128xbf16, #tpu.memory_space<vmem>>, vector<128x128xbf16>
    %cst_16 = arith.constant dense<0.000000e+00> : vector<128x128xf32>
    %24 = tpu.matmul %22, %23, %cst_16 {dimension_numbers = #tpu.dot_dimension_numbers<[1], [0], [0], [1], [0, 0, 1, 1], [], []>} : vector<128x128xbf16>, vector<128x128xbf16>, vector<128x128xf32> -> vector<128x128xf32>
    %c0_17 = arith.constant 0 : index
    %c0_18 = arith.constant 0 : index
    %25 = vector.load %arg7[%c0_17, %c0_18] : memref<1x128xf32, #tpu.memory_space<vmem>>, vector<1x128xf32>
    %26 = vector.broadcast %25 : vector<1x128xf32> to vector<128x128xf32>
    %27 = arith.addf %24, %26 : vector<128x128xf32>
    %c0_19 = arith.constant 0 : index
    %c0_20 = arith.constant 0 : index
    %28 = vector.load %arg8[%c0_19, %c0_20] : memref<128x128xf32, #tpu.memory_space<vmem>>, vector<128x128xf32>
    tpu.vector_store %arg8[%c0_19, %c0_20], %27 {strides = array<i32>} : memref<128x128xf32, #tpu.memory_space<vmem>>, vector<128x128xf32>,
    return
  }
  func.func @transform_0(%arg0: i32) -> (i32, i32) {
    %c0_i32 = arith.constant 0 : i32
    %c0_i32_0 = arith.constant 0 : i32
    return %arg0, %c0_i32 : i32, i32
  }
  func.func @transform_1(%arg0: i32) -> (i32, i32) {
    %c0_i32 = arith.constant 0 : i32
    %c0_i32_0 = arith.constant 0 : i32
    %c0_i32_1 = arith.constant 0 : i32
    return %c0_i32, %c0_i32_0 : i32, i32
  }
  func.func @transform_2(%arg0: i32) -> (i32, i32) {
    %c0_i32 = arith.constant 0 : i32
    %c0_i32_0 = arith.constant 0 : i32
    %c0_i32_1 = arith.constant 0 : i32
    return %c0_i32, %c0_i32_0 : i32, i32
  }
  func.func @transform_3(%arg0: i32) -> (i32, i32) {
    %c0_i32 = arith.constant 0 : i32
    %c0_i32_0 = arith.constant 0 : i32
    %c0_i32_1 = arith.constant 0 : i32
    return %c0_i32, %c0_i32_0 : i32, i32
  }
  func.func @transform_4(%arg0: i32) -> (i32, i32) {
    %c0_i32 = arith.constant 0 : i32
    %c0_i32_0 = arith.constant 0 : i32
    %c0_i32_1 = arith.constant 0 : i32
    return %c0_i32, %c0_i32_0 : i32, i32
  }
  func.func @transform_5(%arg0: i32) -> (i32, i32) {
    %c0_i32 = arith.constant 0 : i32
    %c0_i32_0 = arith.constant 0 : i32
    %c0_i32_1 = arith.constant 0 : i32
    return %c0_i32, %c0_i32_0 : i32, i32
  }
  func.func @transform_6(%arg0: i32) -> (i32, i32) {
    %c0_i32 = arith.constant 0 : i32
    %c0_i32_0 = arith.constant 0 : i32
    %c0_i32_1 = arith.constant 0 : i32
    return %c0_i32, %c0_i32_0 : i32, i32
  }
  func.func @transform_7(%arg0: i32) -> (i32, i32) {
    %c0_i32 = arith.constant 0 : i32
    %c0_i32_0 = arith.constant 0 : i32
    return %arg0, %c0_i32 : i32, i32
  }
}

</mosaic_0001>

<llo_original>
// kernel: tpu_custom_call.1
$region0: #{tpu_custom_call.1}
  #allocation0 [shape = 'u32[]', space=smem, size = 0x4, offset = 0x4, fixed_abs, tag = 'smem constant byte address 0x4 - core index']
  #allocation1 [shape = 'u32[72,128]{1,0:T(1,128)}', space=vmem, size = 0x9000, scoped, tag = 'internal scratch']
  %s0 = inlined_call_operand.hbm [shape: bf16[256,128], index: 0, kind: input, shape index: {}]
  %s1 = inlined_call_operand.hbm [shape: bf16[128,128], index: 1, kind: input, shape index: {}]
  %s2 = inlined_call_operand.vmem [shape: f32[1,128], index: 2, kind: input, shape index: {}]
  %s3 = inlined_call_operand.hbm [shape: bf16[128,128], index: 3, kind: input, shape index: {}]
  %s4 = inlined_call_operand.vmem [shape: f32[1,128], index: 4, kind: input, shape index: {}]
  %s5 = inlined_call_operand.hbm [shape: bf16[128,128], index: 5, kind: input, shape index: {}]
  %s6 = inlined_call_operand.vmem [shape: f32[1,128], index: 6, kind: input, shape index: {}]
  %s7 = inlined_call_operand.hbm [shape: f32[256,128], index: 7, kind: output, shape index: {}]
  %s8 = sld [smem:[#allocation0]]
  $region77: #{tpu_custom_call.1} parent=0
    _
  %s10 = ssub.s32 1, %s8
  %s11 = scalar_select 0, %s10, %s8
  $region1: #{tpu_custom_call.1} parent=0
    #allocation2 [shape = 'u8[65536]{0}', space=vmem, size = 0x10000, scoped, tag = 'input window, operand 0']
    #allocation3 [shape = 's32[2]{0}', space=sflag, size = 0x8, scoped, tag = 'scoped memory for tpu_custom_call.1']
    #allocation4 [shape = 's32[2]{0}', space=sflag, size = 0x8, scoped, tag = 'scoped memory for tpu_custom_call.1']
    #allocation5 [shape = 'u8[32768]{0}', space=vmem, size = 0x8000, scoped, tag = 'input window, operand 1, single buffered']
    #allocation6 [shape = 's32[1]{0}', space=sflag, size = 0x4, scoped, tag = 'scoped memory for tpu_custom_call.1']
    #allocation7 [shape = 'u8[32768]{0}', space=vmem, size = 0x8000, scoped, tag = 'input window, operand 3, single buffered']
    #allocation8 [shape = 'u8[32768]{0}', space=vmem, size = 0x8000, scoped, tag = 'input window, operand 5, single buffered']
    #allocation9 [shape = 's32[1]{0}', space=sflag, size = 0x4, scoped, tag = 'scoped memory for tpu_custom_call.1']
    #allocation10 [shape = 'u8[131072]{0}', space=vmem, size = 0x20000, scoped, tag = 'output window, operand 0']
    %12 = vsyncpa [#allocation3], 0
    %s13 = scalar_lea.sflag [#allocation3], 1
    %14 = vsyncpa %s13, 0
    %15 = vsyncpa [#allocation6], 0
    %16 = vsyncpa [#allocation9], 0
    %17 = vsyncpa [#allocation4], 0
    %s18 = scalar_lea.sflag [#allocation4], 1
    %19 = vsyncpa %s18, 0
    loop: start=0, step=1, limit=4
    $region2: #{tpu_custom_call.1} parent=1 // loop_pre_header
      _
    $region3: #{tpu_custom_call.1} parent=1 // loop_header
      %s21 = sphi 0, %s25
      %p22 = scmp.ge.s32.totalorder %s21, 4
      %s31 = sphi 0, %s33
      %s34 = sphi 0, %s31
      %s35 = sphi 0, %s34
      %s51 = sphi 0, %s35
      %s55 = sphi 0, %s55
      %s57 = sphi 0, %s55
      %s58 = sphi 0, %s57
      %s72 = sphi 0, %s58
      %s76 = sphi 0, %s76
      %s78 = sphi 0, %s76
      %s79 = sphi 0, %s78
      %s93 = sphi 0, %s79
      %s97 = sphi 0, %s97
      %s99 = sphi 0, %s97
      %s100 = sphi 0, %s99
      %s114 = sphi 0, %s100
      %s118 = sphi 0, %s118
      %s120 = sphi 0, %s118
      %s121 = sphi 0, %s120
      %s135 = sphi 0, %s121
      %s139 = sphi 0, %s139
      %s141 = sphi 0, %s139
      %s142 = sphi 0, %s141
      %s156 = sphi 0, %s142
      %s160 = sphi 0, %s160
      %s162 = sphi 0, %s160
      %s163 = sphi 0, %s162
      %s177 = sphi 0, %s163
      %s183 = sphi 0, %s185
      %s186 = sphi 0, %s183
      %s187 = sphi 0, %s186
      %s203 = sphi 0, %s187
    $region4: #{tpu_custom_call.1} parent=1 // loop_header_branch
      %24 = sbr.rel (%p22) target = $region8
    $region5: #{tpu_custom_call.1} parent=1 // loop_body
      %s26 = ssub.s32 %s21, 1
      %s27 = ssub.s32 %s21, 2
      %s28 = sadd.s32 %s21, 1
      %s29 = ssub.s32 %s21, %s28
      %p30 = scmp.eq.s32.totalorder %s29, 0
      %s32 = sadd.s32 %s31, 1
      %s33 = scalar_select %p30, %s31, %s32
      %p36 = pneg %p30
      %p37 = scmp.eq.s32.totalorder %s21, 1
      %p38 = por %p36, %p37
      %p39 = scmp.ne.s32.totalorder %s31, %s34
      %p40 = scmp.eq.s32.totalorder %s21, 0
      %p41 = por %p39, %p40
      %p42 = scmp.ne.s32.totalorder %s31, %s34
      %p43 = scmp.eq.s32.totalorder %s26, 1
      %p44 = por %p42, %p43
      %p45 = scmp.ne.s32.totalorder %s34, %s35
      %p46 = scmp.eq.s32.totalorder %s26, 0
      %p47 = por %p45, %p46
      %p48 = scmp.ne.s32.totalorder %s34, %s35
      %p49 = scmp.eq.s32.totalorder %s27, 1
      %p50 = por %p48, %p49
      %p52 = scmp.ne.s32.totalorder %s35, %s51
      %p53 = scmp.eq.s32.totalorder %s27, 0
      %p54 = por %p52, %p53
      %s56 = sadd.s32 %s55, 1
      %p59 = scmp.eq.s32.totalorder %s21, 1
      %p60 = scmp.ne.s32.totalorder %s55, %s57
      %p61 = scmp.eq.s32.totalorder %s21, 0
      %p62 = por %p60, %p61
      %p63 = scmp.ne.s32.totalorder %s55, %s57
      %p64 = scmp.eq.s32.totalorder %s26, 1
      %p65 = por %p63, %p64
      %p66 = scmp.ne.s32.totalorder %s57, %s58
      %p67 = scmp.eq.s32.totalorder %s26, 0
      %p68 = por %p66, %p67
      %p69 = scmp.ne.s32.totalorder %s57, %s58
      %p70 = scmp.eq.s32.totalorder %s27, 1
      %p71 = por %p69, %p70
      %p73 = scmp.ne.s32.totalorder %s58, %s72
      %p74 = scmp.eq.s32.totalorder %s27, 0
      %p75 = por %p73, %p74
      %s77 = sadd.s32 %s76, 1
      %p80 = scmp.eq.s32.totalorder %s21, 1
      %p81 = scmp.ne.s32.totalorder %s76, %s78
      %p82 = scmp.eq.s32.totalorder %s21, 0
      %p83 = por %p81, %p82
      %p84 = scmp.ne.s32.totalorder %s76, %s78
      %p85 = scmp.eq.s32.totalorder %s26, 1
      %p86 = por %p84, %p85
      %p87 = scmp.ne.s32.totalorder %s78, %s79
      %p88 = scmp.eq.s32.totalorder %s26, 0
      %p89 = por %p87, %p88
      %p90 = scmp.ne.s32.totalorder %s78, %s79
      %p91 = scmp.eq.s32.totalorder %s27, 1
      %p92 = por %p90, %p91
      %p94 = scmp.ne.s32.totalorder %s79, %s93
      %p95 = scmp.eq.s32.totalorder %s27, 0
      %p96 = por %p94, %p95
      %s98 = sadd.s32 %s97, 1
      %p101 = scmp.eq.s32.totalorder %s21, 1
      %p102 = scmp.ne.s32.totalorder %s97, %s99
      %p103 = scmp.eq.s32.totalorder %s21, 0
      %p104 = por %p102, %p103
      %p105 = scmp.ne.s32.totalorder %s97, %s99
      %p106 = scmp.eq.s32.totalorder %s26, 1
      %p107 = por %p105, %p106
      %p108 = scmp.ne.s32.totalorder %s99, %s100
      %p109 = scmp.eq.s32.totalorder %s26, 0
      %p110 = por %p108, %p109
      %p111 = scmp.ne.s32.totalorder %s99, %s100
      %p112 = scmp.eq.s32.totalorder %s27, 1
      %p113 = por %p111, %p112
      %p115 = scmp.ne.s32.totalorder %s100, %s114
      %p116 = scmp.eq.s32.totalorder %s27, 0
      %p117 = por %p115, %p116
      %s119 = sadd.s32 %s118, 1
      %p122 = scmp.eq.s32.totalorder %s21, 1
      %p123 = scmp.ne.s32.totalorder %s118, %s120
      %p124 = scmp.eq.s32.totalorder %s21, 0
      %p125 = por %p123, %p124
      %p126 = scmp.ne.s32.totalorder %s118, %s120
      %p127 = scmp.eq.s32.totalorder %s26, 1
      %p128 = por %p126, %p127
      %p129 = scmp.ne.s32.totalorder %s120, %s121
      %p130 = scmp.eq.s32.totalorder %s26, 0
      %p131 = por %p129, %p130
      %p132 = scmp.ne.s32.totalorder %s120, %s121
      %p133 = scmp.eq.s32.totalorder %s27, 1
      %p134 = por %p132, %p133
      %p136 = scmp.ne.s32.totalorder %s121, %s135
      %p137 = scmp.eq.s32.totalorder %s27, 0
      %p138 = por %p136, %p137
      %s140 = sadd.s32 %s139, 1
      %p143 = scmp.eq.s32.totalorder %s21, 1
      %p144 = scmp.ne.s32.totalorder %s139, %s141
      %p145 = scmp.eq.s32.totalorder %s21, 0
      %p146 = por %p144, %p145
      %p147 = scmp.ne.s32.totalorder %s139, %s141
      %p148 = scmp.eq.s32.totalorder %s26, 1
      %p149 = por %p147, %p148
      %p150 = scmp.ne.s32.totalorder %s141, %s142
      %p151 = scmp.eq.s32.totalorder %s26, 0
      %p152 = por %p150, %p151
      %p153 = scmp.ne.s32.totalorder %s141, %s142
      %p154 = scmp.eq.s32.totalorder %s27, 1
      %p155 = por %p153, %p154
      %p157 = scmp.ne.s32.totalorder %s142, %s156
      %p158 = scmp.eq.s32.totalorder %s27, 0
      %p159 = por %p157, %p158
      %s161 = sadd.s32 %s160, 1
      %p164 = scmp.eq.s32.totalorder %s21, 1
      %p165 = scmp.ne.s32.totalorder %s160, %s162
      %p166 = scmp.eq.s32.totalorder %s21, 0
      %p167 = por %p165, %p166
      %p168 = scmp.ne.s32.totalorder %s160, %s162
      %p169 = scmp.eq.s32.totalorder %s26, 1
      %p170 = por %p168, %p169
      %p171 = scmp.ne.s32.totalorder %s162, %s163
      %p172 = scmp.eq.s32.totalorder %s26, 0
      %p173 = por %p171, %p172
      %p174 = scmp.ne.s32.totalorder %s162, %s163
      %p175 = scmp.eq.s32.totalorder %s27, 1
      %p176 = por %p174, %p175
      %p178 = scmp.ne.s32.totalorder %s163, %s177
      %p179 = scmp.eq.s32.totalorder %s27, 0
      %p180 = por %p178, %p179
      %s181 = ssub.s32 %s21, %s28
      %p182 = scmp.eq.s32.totalorder %s181, 0
      %s184 = sadd.s32 %s183, 1
      %s185 = scalar_select %p182, %s183, %s184
      %p188 = pneg %p182
      %p189 = scmp.eq.s32.totalorder %s21, 1
      %p190 = por %p188, %p189
      %p191 = scmp.ne.s32.totalorder %s183, %s186
      %p192 = scmp.eq.s32.totalorder %s21, 0
      %p193 = por %p191, %p192
      %p194 = scmp.ne.s32.totalorder %s183, %s186
      %p195 = scmp.eq.s32.totalorder %s26, 1
      %p196 = por %p194, %p195
      %p197 = scmp.ne.s32.totalorder %s186, %s187
      %p198 = scmp.eq.s32.totalorder %s26, 0
      %p199 = por %p197, %p198
      %p200 = scmp.ne.s32.totalorder %s186, %s187
      %p201 = scmp.eq.s32.totalorder %s27, 1
      %p202 = por %p200, %p201
      %p204 = scmp.ne.s32.totalorder %s187, %s203
      %p205 = scmp.eq.s32.totalorder %s27, 0
      %p206 = por %p204, %p205
      %p207 = scmp.le.s32.totalorder 1, %s21
      %p208 = scmp.lt.s32.totalorder %s21, 3
      %p209 = pnand %p207, %p208
      %p210 = pneg %p209
      // Predicated region
      $region9: #{tpu_custom_call.1} parent=5 // pred_check
        _
      $region10: #{tpu_custom_call.1} parent=5 // pred_check_branch
        %212 = sbr.rel (%p209) target = $region12
      $region11: #{tpu_custom_call.1} parent=5 // pred_region
        %s213 = ssub.s32 %s21, 1
        // Predicated region
        $region13: #{tpu_custom_call.1} parent=11 // pred_check
          %p214 = pneg %p68
        $region14: #{tpu_custom_call.1} parent=11 // pred_check_branch
          %216 = sbr.rel (%p214) target = $region16
        $region15: #{tpu_custom_call.1} parent=11 // pred_region
          %218 = vsyncadd [#allocation6], 0
          %s219 = sshll.u32 %s1, 4
          %s220 = int_to_ptr.hbm [resolvable:$true] %s219
          %s221 = sshll.u32 [#allocation5], 4
          %s222 = int_to_ptr.vmem [resolvable:$true] %s221
          %227 = dma.hbm_to_vmem [thread:$0]  %s220, 1024, %s222, [#allocation6], 64, 64, 4
        $region16: #{tpu_custom_call.1} parent=11 // pred_fallthru
          _
        // Predicated region
        $region17: #{tpu_custom_call.1} parent=11 // pred_check
          %p228 = pneg %p89
        $region18: #{tpu_custom_call.1} parent=11 // pred_check_branch
          %230 = sbr.rel (%p228) target = $region20
        $region19: #{tpu_custom_call.1} parent=11 // pred_region
          _
        $region20: #{tpu_custom_call.1} parent=11 // pred_fallthru
          _
        // Predicated region
        $region21: #{tpu_custom_call.1} parent=11 // pred_check
          %p231 = pneg %p110
        $region22: #{tpu_custom_call.1} parent=11 // pred_check_branch
          %233 = sbr.rel (%p231) target = $region24
        $region23: #{tpu_custom_call.1} parent=11 // pred_region
          %235 = vsyncadd [#allocation6], 0
          %s236 = sshll.u32 %s3, 4
          %s237 = int_to_ptr.hbm [resolvable:$true] %s236
          %s238 = sshll.u32 [#allocation7], 4
          %s239 = int_to_ptr.vmem [resolvable:$true] %s238
          %244 = dma.hbm_to_vmem [thread:$0]  %s237, 1024, %s239, [#allocation6], 64, 64, 4
        $region24: #{tpu_custom_call.1} parent=11 // pred_fallthru
          _
        // Predicated region
        $region25: #{tpu_custom_call.1} parent=11 // pred_check
          %p245 = pneg %p131
        $region26: #{tpu_custom_call.1} parent=11 // pred_check_branch
          %247 = sbr.rel (%p245) target = $region28
        $region27: #{tpu_custom_call.1} parent=11 // pred_region
          _
        $region28: #{tpu_custom_call.1} parent=11 // pred_fallthru
          _
        // Predicated region
        $region29: #{tpu_custom_call.1} parent=11 // pred_check
          %p248 = pneg %p152
        $region30: #{tpu_custom_call.1} parent=11 // pred_check_branch
          %250 = sbr.rel (%p248) target = $region32
        $region31: #{tpu_custom_call.1} parent=11 // pred_region
          %252 = vsyncadd [#allocation9], 0
          %s253 = sshll.u32 %s5, 4
          %s254 = int_to_ptr.hbm [resolvable:$true] %s253
          %s255 = sshll.u32 [#allocation8], 4
          %s256 = int_to_ptr.vmem [resolvable:$true] %s255
          %261 = dma.hbm_to_vmem [thread:$0]  %s254, 1024, %s256, [#allocation9], 64, 64, 4
        $region32: #{tpu_custom_call.1} parent=11 // pred_fallthru
          _
        // Predicated region
        $region33: #{tpu_custom_call.1} parent=11 // pred_check
          %p262 = pneg %p173
        $region34: #{tpu_custom_call.1} parent=11 // pred_check_branch
          %264 = sbr.rel (%p262) target = $region36
        $region35: #{tpu_custom_call.1} parent=11 // pred_region
          _
        $region36: #{tpu_custom_call.1} parent=11 // pred_fallthru
          _
      $region12: #{tpu_custom_call.1} parent=5 // pred_fallthru
        _
      %p265 = scmp.lt.s32.totalorder %s21, 2
      // Predicated region
      $region37: #{tpu_custom_call.1} parent=5 // pred_check
        %p266 = pneg %p265
      $region38: #{tpu_custom_call.1} parent=5 // pred_check_branch
        %268 = sbr.rel (%p266) target = $region40
      $region39: #{tpu_custom_call.1} parent=5 // pred_region
        // Predicated region
        $region41: #{tpu_custom_call.1} parent=39 // pred_check
          %p269 = pneg %p41
        $region42: #{tpu_custom_call.1} parent=39 // pred_check_branch
          %271 = sbr.rel (%p269) target = $region44
        $region43: #{tpu_custom_call.1} parent=39 // pred_region
          %s272 = sand.u32 %s31, 1
          %s273 = scalar_lea.sflag [#allocation3], %s272
          %s274 = sand.u32 %s31, 1
          %s275 = smul.addr %s274, 64
          %s276 = scalar_lea.vmem [#allocation2], %s275
          %s277 = smul.u32 16, %s21
          %279 = vsyncadd %s273, 0
          %s280 = smul.addr %s277, 4
          %s281 = scalar_lea.hbm %s0, %s280
          %s282 = sshll.u32 %s281, 4
          %s283 = int_to_ptr.hbm [resolvable:$true] %s282
          %s284 = sshll.u32 %s276, 4
          %s285 = int_to_ptr.vmem [resolvable:$true] %s284
          %290 = dma.hbm_to_vmem [thread:$0]  %s283, 1024, %s285, %s273, 64, 64, 4
        $region44: #{tpu_custom_call.1} parent=39 // pred_fallthru
          _
      $region40: #{tpu_custom_call.1} parent=5 // pred_fallthru
        _
      %p291 = scmp.le.s32.totalorder 1, %s21
      %p292 = scmp.lt.s32.totalorder %s21, 3
      %p293 = pnand %p291, %p292
      %p294 = pneg %p293
      // Predicated region
      $region45: #{tpu_custom_call.1} parent=5 // pred_check
        _
      $region46: #{tpu_custom_call.1} parent=5 // pred_check_branch
        %296 = sbr.rel (%p293) target = $region48
      $region47: #{tpu_custom_call.1} parent=5 // pred_region
        %s297 = ssub.s32 %s21, 1
        %s298 = sand.u32 %s34, 1
        %s299 = scalar_lea.sflag [#allocation3], %s298
        %s300 = sand.u32 %s34, 1
        %s301 = smul.addr %s300, 64
        %s302 = scalar_lea.vmem [#allocation2], %s301
        // Predicated region
        $region49: #{tpu_custom_call.1} parent=47 // pred_check
          %p303 = pneg %p47
        $region50: #{tpu_custom_call.1} parent=47 // pred_check_branch
          %305 = sbr.rel (%p303) target = $region52
        $region51: #{tpu_custom_call.1} parent=47 // pred_region
          %307 = dma.done %s299, 1024
        $region52: #{tpu_custom_call.1} parent=47 // pred_fallthru
          _
        // Predicated region
        $region53: #{tpu_custom_call.1} parent=47 // pred_check
          %p308 = pneg %p68
        $region54: #{tpu_custom_call.1} parent=47 // pred_check_branch
          %310 = sbr.rel (%p308) target = $region56
        $region55: #{tpu_custom_call.1} parent=47 // pred_region
          %312 = dma.done [#allocation6], 1024
        $region56: #{tpu_custom_call.1} parent=47 // pred_fallthru
          _
        // Predicated region
        $region57: #{tpu_custom_call.1} parent=47 // pred_check
          %p313 = pneg %p110
        $region58: #{tpu_custom_call.1} parent=47 // pred_check_branch
          %315 = sbr.rel (%p313) target = $region60
        $region59: #{tpu_custom_call.1} parent=47 // pred_region
          %317 = dma.done [#allocation6], 1024
        $region60: #{tpu_custom_call.1} parent=47 // pred_fallthru
          _
        // Predicated region
        $region61: #{tpu_custom_call.1} parent=47 // pred_check
          %p318 = pneg %p152
        $region62: #{tpu_custom_call.1} parent=47 // pred_check_branch
          %320 = sbr.rel (%p318) target = $region64
        $region63: #{tpu_custom_call.1} parent=47 // pred_region
          %322 = dma.done [#allocation9], 1024
        $region64: #{tpu_custom_call.1} parent=47 // pred_fallthru
          _
        %s323 = sand.u32 %s34, 1
        %s324 = scalar_lea.sflag [#allocation3], %s323
        %s325 = sand.u32 %s34, 1
        %s326 = smul.addr %s325, 64
        %s327 = scalar_lea.vmem [#allocation2], %s326
        %p328 = pneg %p47
        %p329 = pneg %p44
        %p330 = pneg %p68
        %p331 = pneg %p65
        %p332 = pneg %p89
        %p333 = pneg %p86
        %p334 = pneg %p110
        %p335 = pneg %p107
        %p336 = pneg %p131
        %p337 = pneg %p128
        %p338 = pneg %p152
        %p339 = pneg %p149
        %p340 = pneg %p173
        %p341 = pneg %p170
        %p342 = pneg %p199
        %p343 = pneg %p196
        %s344 = sand.u32 %s186, 1
        %s345 = scalar_lea.sflag [#allocation4], %s344
        %s346 = sand.u32 %s186, 1
        %s347 = smul.addr %s346, 128
        %s348 = scalar_lea.vmem [#allocation10], %s347
        %s349 = smul.u32 16, %s26
        %s350 = smul.u32 16, %s26
        %v351 = vld [vmem:[%s302] sm:$0xf]
        %v352 = vld [vmem:[%s302 + $0x4] sm:$0xf]
        %v353 = vld [vmem:[%s302 + $0x8] sm:$0xf]
        %v354 = vld [vmem:[%s302 + $0xc] sm:$0xf]
        %v355 = vld [vmem:[%s302 + $0x10] sm:$0xf]
        %v356 = vld [vmem:[%s302 + $0x14] sm:$0xf]
        %v357 = vld [vmem:[%s302 + $0x18] sm:$0xf]
        %v358 = vld [vmem:[%s302 + $0x1c] sm:$0xf]
        %v359 = vld [vmem:[%s302 + $0x20] sm:$0xf]
        %v360 = vld [vmem:[%s302 + $0x24] sm:$0xf]
        %v361 = vld [vmem:[%s302 + $0x28] sm:$0xf]
        %v362 = vld [vmem:[%s302 + $0x2c] sm:$0xf]
        %v363 = vld [vmem:[%s302 + $0x30] sm:$0xf]
        %v364 = vld [vmem:[%s302 + $0x34] sm:$0xf]
        %v365 = vld [vmem:[%s302 + $0x38] sm:$0xf]
        %v366 = vld [vmem:[%s302 + $0x3c] sm:$0xf]
        %v367 = vld [vmem:[#allocation5] sm:$0xf]
        %v368 = vld [vmem:[#allocation5 + $0x4] sm:$0xf]
        %v369 = vld [vmem:[#allocation5 + $0x8] sm:$0xf]
        %v370 = vld [vmem:[#allocation5 + $0xc] sm:$0xf]
        %v371 = vld [vmem:[#allocation5 + $0x10] sm:$0xf]
        %v372 = vld [vmem:[#allocation5 + $0x14] sm:$0xf]
        %v373 = vld [vmem:[#allocation5 + $0x18] sm:$0xf]
        %v374 = vld [vmem:[#allocation5 + $0x1c] sm:$0xf]
        %v375 = vld [vmem:[#allocation5 + $0x20] sm:$0xf]
        %v376 = vld [vmem:[#allocation5 + $0x24] sm:$0xf]
        %v377 = vld [vmem:[#allocation5 + $0x28] sm:$0xf]
        %v378 = vld [vmem:[#allocation5 + $0x2c] sm:$0xf]
        %v379 = vld [vmem:[#allocation5 + $0x30] sm:$0xf]
        %v380 = vld [vmem:[#allocation5 + $0x34] sm:$0xf]
        %v381 = vld [vmem:[#allocation5 + $0x38] sm:$0xf]
        %v382 = vld [vmem:[#allocation5 + $0x3c] sm:$0xf]
        %v383 = vld [vmem:[%s2] sm:$0x1]
        %v385 = vperm.slane %v383, 0
        %v403 = vunpack.c.l.b16 %v351
        %v404 = vunpack.c.l.b16 %v352
        %v405 = vunpack.c.l.b16 %v353
        %v406 = vunpack.c.l.b16 %v354
        %v407 = vunpack.c.l.b16 %v355
        %v408 = vunpack.c.l.b16 %v356
        %v409 = vunpack.c.l.b16 %v357
        %v410 = vunpack.c.l.b16 %v358
        %v411 = vunpack.c.l.b16 %v359
        %v412 = vunpack.c.l.b16 %v360
        %v413 = vunpack.c.l.b16 %v361
        %v414 = vunpack.c.l.b16 %v362
        %v415 = vunpack.c.l.b16 %v363
        %v416 = vunpack.c.l.b16 %v364
        %v417 = vunpack.c.l.b16 %v365
        %v418 = vunpack.c.l.b16 %v366
        %v419 = vpack.c.b16 %v404, %v403
        %v420 = vpack.c.b16 %v406, %v405
        %v421 = vpack.c.b16 %v408, %v407
        %v422 = vpack.c.b16 %v410, %v409
        %v423 = vpack.c.b16 %v412, %v411
        %v424 = vpack.c.b16 %v414, %v413
        %v425 = vpack.c.b16 %v416, %v415
        %v426 = vpack.c.b16 %v418, %v417
        %v451 = vunpack.c.l.b16 %v367
        %v452 = vunpack.c.l.b16 %v368
        %v453 = vunpack.c.l.b16 %v369
        %v454 = vunpack.c.l.b16 %v370
        %v455 = vunpack.c.l.b16 %v371
        %v456 = vunpack.c.l.b16 %v372
        %v457 = vunpack.c.l.b16 %v373
        %v458 = vunpack.c.l.b16 %v374
        %v459 = vunpack.c.l.b16 %v375
        %v460 = vunpack.c.l.b16 %v376
        %v461 = vunpack.c.l.b16 %v377
        %v462 = vunpack.c.l.b16 %v378
        %v463 = vunpack.c.l.b16 %v379
        %v464 = vunpack.c.l.b16 %v380
        %v465 = vunpack.c.l.b16 %v381
        %v466 = vunpack.c.l.b16 %v382
        %v467 = vpack.c.b16 %v452, %v451
        %v468 = vpack.c.b16 %v454, %v453
        %v469 = vpack.c.b16 %v456, %v455
        %v470 = vpack.c.b16 %v458, %v457
        %v471 = vpack.c.b16 %v460, %v459
        %v472 = vpack.c.b16 %v462, %v461
        %v473 = vpack.c.b16 %v464, %v463
        %v474 = vpack.c.b16 %v466, %v465
        %483 = vmatpush.bf16.msra.mxu0 %v474
        %484 = vmatpush.bf16.msra.mxu0 %v473
        %485 = vmatpush.bf16.msra.mxu0 %v472
        %486 = vmatpush.bf16.msra.mxu0 %v471
        %487 = vmatpush.bf16.msra.mxu0 %v470
        %488 = vmatpush.bf16.msra.mxu0 %v469
        %489 = vmatpush.bf16.msra.mxu0 %v468
        %490 = vmatpush.bf16.msra.mxu0 %v467
        %491 = vmatmul.bf16.gmra.mxu0 %v419
        %v492 = vpop.f32.mrf.mxu0
        %v493 = vadd.f32 %v385, %v492
        %v494 = vpop.f32.mrf.mxu0
        %v495 = vadd.f32 %v385, %v494
        %496 = vmatmul.bf16.gmra.mxu0 %v420
        %v497 = vpop.f32.mrf.mxu0
        %v498 = vadd.f32 %v385, %v497
        %v499 = vpop.f32.mrf.mxu0
        %v500 = vadd.f32 %v385, %v499
        %501 = vmatmul.bf16.gmra.mxu0 %v421
        %v502 = vpop.f32.mrf.mxu0
        %v503 = vadd.f32 %v385, %v502
        %v504 = vpop.f32.mrf.mxu0
        %v505 = vadd.f32 %v385, %v504
        %506 = vmatmul.bf16.gmra.mxu0 %v422
        %v507 = vpop.f32.mrf.mxu0
        %v508 = vadd.f32 %v385, %v507
        %v509 = vpop.f32.mrf.mxu0
        %v510 = vadd.f32 %v385, %v509
        %511 = vmatmul.bf16.gmra.mxu0 %v423
        %v512 = vpop.f32.mrf.mxu0
        %v513 = vadd.f32 %v385, %v512
        %v514 = vpop.f32.mrf.mxu0
        %v515 = vadd.f32 %v385, %v514
        %516 = vmatmul.bf16.gmra.mxu0 %v424
        %v517 = vpop.f32.mrf.mxu0
        %v518 = vadd.f32 %v385, %v517
        %v519 = vpop.f32.mrf.mxu0
        %v520 = vadd.f32 %v385, %v519
        %521 = vmatmul.bf16.gmra.mxu0 %v425
        %v522 = vpop.f32.mrf.mxu0
        %v523 = vadd.f32 %v385, %v522
        %v524 = vpop.f32.mrf.mxu0
        %v525 = vadd.f32 %v385, %v524
        %526 = vmatmul.bf16.gmra.mxu0 %v426
        %v527 = vpop.f32.mrf.mxu0
        %v528 = vadd.f32 %v385, %v527
        %v529 = vpop.f32.mrf.mxu0
        %v530 = vadd.f32 %v385, %v529
        %531 = vdwg.mxu0
        %vm532 = vcmp.gt.f32.partialorder %v493, 0.0
        %vm533 = vcmp.gt.f32.partialorder %v495, 0.0
        %vm534 = vcmp.gt.f32.partialorder %v498, 0.0
        %vm535 = vcmp.gt.f32.partialorder %v500, 0.0
        %vm536 = vcmp.gt.f32.partialorder %v503, 0.0
        %vm537 = vcmp.gt.f32.partialorder %v505, 0.0
        %vm538 = vcmp.gt.f32.partialorder %v508, 0.0
        %vm539 = vcmp.gt.f32.partialorder %v510, 0.0
        %vm540 = vcmp.gt.f32.partialorder %v513, 0.0
        %vm541 = vcmp.gt.f32.partialorder %v515, 0.0
        %vm542 = vcmp.gt.f32.partialorder %v518, 0.0
        %vm543 = vcmp.gt.f32.partialorder %v520, 0.0
        %vm544 = vcmp.gt.f32.partialorder %v523, 0.0
        %vm545 = vcmp.gt.f32.partialorder %v525, 0.0
        %vm546 = vcmp.gt.f32.partialorder %v528, 0.0
        %vm547 = vcmp.gt.f32.partialorder %v530, 0.0
        %v548 = vmul.f32 %v493, 0.01
        %v549 = vmul.f32 %v495, 0.01
        %v550 = vmul.f32 %v498, 0.01
        %v551 = vmul.f32 %v500, 0.01
        %v552 = vmul.f32 %v503, 0.01
        %v553 = vmul.f32 %v505, 0.01
        %v554 = vmul.f32 %v508, 0.01
        %v555 = vmul.f32 %v510, 0.01
        %v556 = vmul.f32 %v513, 0.01
        %v557 = vmul.f32 %v515, 0.01
        %v558 = vmul.f32 %v518, 0.01
        %v559 = vmul.f32 %v520, 0.01
        %v560 = vmul.f32 %v523, 0.01
        %v561 = vmul.f32 %v525, 0.01
        %v562 = vmul.f32 %v528, 0.01
        %v563 = vmul.f32 %v530, 0.01
        %v564 = vsel %vm532, %v493, %v548
        %v565 = vsel %vm533, %v495, %v549
        %v566 = vsel %vm534, %v498, %v550
        %v567 = vsel %vm535, %v500, %v551
        %v568 = vsel %vm536, %v503, %v552
        %v569 = vsel %vm537, %v505, %v553
        %v570 = vsel %vm538, %v508, %v554
        %v571 = vsel %vm539, %v510, %v555
        %v572 = vsel %vm540, %v513, %v556
        %v573 = vsel %vm541, %v515, %v557
        %v574 = vsel %vm542, %v518, %v558
        %v575 = vsel %vm543, %v520, %v559
        %v576 = vsel %vm544, %v523, %v560
        %v577 = vsel %vm545, %v525, %v561
        %v578 = vsel %vm546, %v528, %v562
        %v579 = vsel %vm547, %v530, %v563
        %v580 = vpack.c.bf16 %v565, %v564
        %v581 = vpack.c.bf16 %v567, %v566
        %v582 = vpack.c.bf16 %v569, %v568
        %v583 = vpack.c.bf16 %v571, %v570
        %v584 = vpack.c.bf16 %v573, %v572
        %v585 = vpack.c.bf16 %v575, %v574
        %v586 = vpack.c.bf16 %v577, %v576
        %v587 = vpack.c.bf16 %v579, %v578
        %v588 = vld [vmem:[#allocation7] sm:$0xf]
        %v589 = vld [vmem:[#allocation7 + $0x4] sm:$0xf]
        %v590 = vld [vmem:[#allocation7 + $0x8] sm:$0xf]
        %v591 = vld [vmem:[#allocation7 + $0xc] sm:$0xf]
        %v592 = vld [vmem:[#allocation7 + $0x10] sm:$0xf]
        %v593 = vld [vmem:[#allocation7 + $0x14] sm:$0xf]
        %v594 = vld [vmem:[#allocation7 + $0x18] sm:$0xf]
        %v595 = vld [vmem:[#allocation7 + $0x1c] sm:$0xf]
        %v596 = vld [vmem:[#allocation7 + $0x20] sm:$0xf]
        %v597 = vld [vmem:[#allocation7 + $0x24] sm:$0xf]
        %v598 = vld [vmem:[#allocation7 + $0x28] sm:$0xf]
        %v599 = vld [vmem:[#allocation7 + $0x2c] sm:$0xf]
        %v600 = vld [vmem:[#allocation7 + $0x30] sm:$0xf]
        %v601 = vld [vmem:[#allocation7 + $0x34] sm:$0xf]
        %v602 = vld [vmem:[#allocation7 + $0x38] sm:$0xf]
        %v603 = vld [vmem:[#allocation7 + $0x3c] sm:$0xf]
        %v604 = vld [vmem:[%s4] sm:$0x1]
        %v606 = vperm.slane %v604, 0
        %v624 = vunpack.c.l.b16 %v588
        %v625 = vunpack.c.l.b16 %v589
        %v626 = vunpack.c.l.b16 %v590
        %v627 = vunpack.c.l.b16 %v591
        %v628 = vunpack.c.l.b16 %v592
        %v629 = vunpack.c.l.b16 %v593
        %v630 = vunpack.c.l.b16 %v594
        %v631 = vunpack.c.l.b16 %v595
        %v632 = vunpack.c.l.b16 %v596
        %v633 = vunpack.c.l.b16 %v597
        %v634 = vunpack.c.l.b16 %v598
        %v635 = vunpack.c.l.b16 %v599
        %v636 = vunpack.c.l.b16 %v600
        %v637 = vunpack.c.l.b16 %v601
        %v638 = vunpack.c.l.b16 %v602
        %v639 = vunpack.c.l.b16 %v603
        %v640 = vpack.c.b16 %v625, %v624
        %v641 = vpack.c.b16 %v627, %v626
        %v642 = vpack.c.b16 %v629, %v628
        %v643 = vpack.c.b16 %v631, %v630
        %v644 = vpack.c.b16 %v633, %v632
        %v645 = vpack.c.b16 %v635, %v634
        %v646 = vpack.c.b16 %v637, %v636
        %v647 = vpack.c.b16 %v639, %v638
        %656 = vmatpush.bf16.msra.mxu0 %v647
        %657 = vmatpush.bf16.msra.mxu0 %v646
        %658 = vmatpush.bf16.msra.mxu0 %v645
        %659 = vmatpush.bf16.msra.mxu0 %v644
        %660 = vmatpush.bf16.msra.mxu0 %v643
        %661 = vmatpush.bf16.msra.mxu0 %v642
        %662 = vmatpush.bf16.msra.mxu0 %v641
        %663 = vmatpush.bf16.msra.mxu0 %v640
        %664 = vmatmul.bf16.gmra.mxu0 %v580
        %v665 = vpop.f32.mrf.mxu0
        %v666 = vadd.f32 %v606, %v665
        %v667 = vpop.f32.mrf.mxu0
        %v668 = vadd.f32 %v606, %v667
        %669 = vmatmul.bf16.gmra.mxu0 %v581
        %v670 = vpop.f32.mrf.mxu0
        %v671 = vadd.f32 %v606, %v670
        %v672 = vpop.f32.mrf.mxu0
        %v673 = vadd.f32 %v606, %v672
        %674 = vmatmul.bf16.gmra.mxu0 %v582
        %v675 = vpop.f32.mrf.mxu0
        %v676 = vadd.f32 %v606, %v675
        %v677 = vpop.f32.mrf.mxu0
        %v678 = vadd.f32 %v606, %v677
        %679 = vmatmul.bf16.gmra.mxu0 %v583
        %v680 = vpop.f32.mrf.mxu0
        %v681 = vadd.f32 %v606, %v680
        %v682 = vpop.f32.mrf.mxu0
        %v683 = vadd.f32 %v606, %v682
        %684 = vmatmul.bf16.gmra.mxu0 %v584
        %v685 = vpop.f32.mrf.mxu0
        %v686 = vadd.f32 %v606, %v685
        %v687 = vpop.f32.mrf.mxu0
        %v688 = vadd.f32 %v606, %v687
        %689 = vmatmul.bf16.gmra.mxu0 %v585
        %v690 = vpop.f32.mrf.mxu0
        %v691 = vadd.f32 %v606, %v690
        %v692 = vpop.f32.mrf.mxu0
        %v693 = vadd.f32 %v606, %v692
        %694 = vmatmul.bf16.gmra.mxu0 %v586
        %v695 = vpop.f32.mrf.mxu0
        %v696 = vadd.f32 %v606, %v695
        %v697 = vpop.f32.mrf.mxu0
        %v698 = vadd.f32 %v606, %v697
        %699 = vmatmul.bf16.gmra.mxu0 %v587
        %v700 = vpop.f32.mrf.mxu0
        %v701 = vadd.f32 %v606, %v700
        %v702 = vpop.f32.mrf.mxu0
        %v703 = vadd.f32 %v606, %v702
        %704 = vdwg.mxu0
        %vm705 = vcmp.gt.f32.partialorder %v666, 0.0
        %vm706 = vcmp.gt.f32.partialorder %v668, 0.0
        %vm707 = vcmp.gt.f32.partialorder %v671, 0.0
        %vm708 = vcmp.gt.f32.partialorder %v673, 0.0
        %vm709 = vcmp.gt.f32.partialorder %v676, 0.0
        %vm710 = vcmp.gt.f32.partialorder %v678, 0.0
        %vm711 = vcmp.gt.f32.partialorder %v681, 0.0
        %vm712 = vcmp.gt.f32.partialorder %v683, 0.0
        %vm713 = vcmp.gt.f32.partialorder %v686, 0.0
        %vm714 = vcmp.gt.f32.partialorder %v688, 0.0
        %vm715 = vcmp.gt.f32.partialorder %v691, 0.0
        %vm716 = vcmp.gt.f32.partialorder %v693, 0.0
        %vm717 = vcmp.gt.f32.partialorder %v696, 0.0
        %vm718 = vcmp.gt.f32.partialorder %v698, 0.0
        %vm719 = vcmp.gt.f32.partialorder %v701, 0.0
        %vm720 = vcmp.gt.f32.partialorder %v703, 0.0
        %v721 = vmul.f32 %v666, 0.01
        %v722 = vmul.f32 %v668, 0.01
        %v723 = vmul.f32 %v671, 0.01
        %v724 = vmul.f32 %v673, 0.01
        %v725 = vmul.f32 %v676, 0.01
        %v726 = vmul.f32 %v678, 0.01
        %v727 = vmul.f32 %v681, 0.01
        %v728 = vmul.f32 %v683, 0.01
        %v729 = vmul.f32 %v686, 0.01
        %v730 = vmul.f32 %v688, 0.01
        %v731 = vmul.f32 %v691, 0.01
        %v732 = vmul.f32 %v693, 0.01
        %v733 = vmul.f32 %v696, 0.01
        %v734 = vmul.f32 %v698, 0.01
        %v735 = vmul.f32 %v701, 0.01
        %v736 = vmul.f32 %v703, 0.01
        %v737 = vsel %vm705, %v666, %v721
        %v738 = vsel %vm706, %v668, %v722
        %v739 = vsel %vm707, %v671, %v723
        %v740 = vsel %vm708, %v673, %v724
        %v741 = vsel %vm709, %v676, %v725
        %v742 = vsel %vm710, %v678, %v726
        %v743 = vsel %vm711, %v681, %v727
        %v744 = vsel %vm712, %v683, %v728
        %v745 = vsel %vm713, %v686, %v729
        %v746 = vsel %vm714, %v688, %v730
        %v747 = vsel %vm715, %v691, %v731
        %v748 = vsel %vm716, %v693, %v732
        %v749 = vsel %vm717, %v696, %v733
        %v750 = vsel %vm718, %v698, %v734
        %v751 = vsel %vm719, %v701, %v735
        %v752 = vsel %vm720, %v703, %v736
        %v753 = vpack.c.bf16 %v738, %v737
        %v754 = vpack.c.bf16 %v740, %v739
        %v755 = vpack.c.bf16 %v742, %v741
        %v756 = vpack.c.bf16 %v744, %v743
        %v757 = vpack.c.bf16 %v746, %v745
        %v758 = vpack.c.bf16 %v748, %v747
        %v759 = vpack.c.bf16 %v750, %v749
        %v760 = vpack.c.bf16 %v752, %v751
        %v761 = vld [vmem:[#allocation8] sm:$0xf]
        %v762 = vld [vmem:[#allocation8 + $0x4] sm:$0xf]
        %v763 = vld [vmem:[#allocation8 + $0x8] sm:$0xf]
        %v764 = vld [vmem:[#allocation8 + $0xc] sm:$0xf]
        %v765 = vld [vmem:[#allocation8 + $0x10] sm:$0xf]
        %v766 = vld [vmem:[#allocation8 + $0x14] sm:$0xf]
        %v767 = vld [vmem:[#allocation8 + $0x18] sm:$0xf]
        %v768 = vld [vmem:[#allocation8 + $0x1c] sm:$0xf]
        %v769 = vld [vmem:[#allocation8 + $0x20] sm:$0xf]
        %v770 = vld [vmem:[#allocation8 + $0x24] sm:$0xf]
        %v771 = vld [vmem:[#allocation8 + $0x28] sm:$0xf]
        %v772 = vld [vmem:[#allocation8 + $0x2c] sm:$0xf]
        %v773 = vld [vmem:[#allocation8 + $0x30] sm:$0xf]
        %v774 = vld [vmem:[#allocation8 + $0x34] sm:$0xf]
        %v775 = vld [vmem:[#allocation8 + $0x38] sm:$0xf]
        %v776 = vld [vmem:[#allocation8 + $0x3c] sm:$0xf]
        %v777 = vld [vmem:[%s6] sm:$0x1]
        %v779 = vperm.slane %v777, 0
        %v797 = vunpack.c.l.b16 %v761
        %v798 = vunpack.c.l.b16 %v762
        %v799 = vunpack.c.l.b16 %v763
        %v800 = vunpack.c.l.b16 %v764
        %v801 = vunpack.c.l.b16 %v765
        %v802 = vunpack.c.l.b16 %v766
        %v803 = vunpack.c.l.b16 %v767
        %v804 = vunpack.c.l.b16 %v768
        %v805 = vunpack.c.l.b16 %v769
        %v806 = vunpack.c.l.b16 %v770
        %v807 = vunpack.c.l.b16 %v771
        %v808 = vunpack.c.l.b16 %v772
        %v809 = vunpack.c.l.b16 %v773
        %v810 = vunpack.c.l.b16 %v774
        %v811 = vunpack.c.l.b16 %v775
        %v812 = vunpack.c.l.b16 %v776
        %v813 = vpack.c.b16 %v798, %v797
        %v814 = vpack.c.b16 %v800, %v799
        %v815 = vpack.c.b16 %v802, %v801
        %v816 = vpack.c.b16 %v804, %v803
        %v817 = vpack.c.b16 %v806, %v805
        %v818 = vpack.c.b16 %v808, %v807
        %v819 = vpack.c.b16 %v810, %v809
        %v820 = vpack.c.b16 %v812, %v811
        %829 = vmatpush.bf16.msra.mxu0 %v820
        %830 = vmatpush.bf16.msra.mxu0 %v819
        %831 = vmatpush.bf16.msra.mxu0 %v818
        %832 = vmatpush.bf16.msra.mxu0 %v817
        %833 = vmatpush.bf16.msra.mxu0 %v816
        %834 = vmatpush.bf16.msra.mxu0 %v815
        %835 = vmatpush.bf16.msra.mxu0 %v814
        %836 = vmatpush.bf16.msra.mxu0 %v813
        %837 = vmatmul.bf16.gmra.mxu0 %v753
        %v838 = vpop.f32.mrf.mxu0
        %v839 = vadd.f32 %v779, %v838
        %v840 = vpop.f32.mrf.mxu0
        %v841 = vadd.f32 %v779, %v840
        %842 = vmatmul.bf16.gmra.mxu0 %v754
        %v843 = vpop.f32.mrf.mxu0
        %v844 = vadd.f32 %v779, %v843
        %v845 = vpop.f32.mrf.mxu0
        %v846 = vadd.f32 %v779, %v845
        %847 = vmatmul.bf16.gmra.mxu0 %v755
        %v848 = vpop.f32.mrf.mxu0
        %v849 = vadd.f32 %v779, %v848
        %v850 = vpop.f32.mrf.mxu0
        %v851 = vadd.f32 %v779, %v850
        %852 = vmatmul.bf16.gmra.mxu0 %v756
        %v853 = vpop.f32.mrf.mxu0
        %v854 = vadd.f32 %v779, %v853
        %v855 = vpop.f32.mrf.mxu0
        %v856 = vadd.f32 %v779, %v855
        %857 = vmatmul.bf16.gmra.mxu0 %v757
        %v858 = vpop.f32.mrf.mxu0
        %v859 = vadd.f32 %v779, %v858
        %v860 = vpop.f32.mrf.mxu0
        %v861 = vadd.f32 %v779, %v860
        %862 = vmatmul.bf16.gmra.mxu0 %v758
        %v863 = vpop.f32.mrf.mxu0
        %v864 = vadd.f32 %v779, %v863
        %v865 = vpop.f32.mrf.mxu0
        %v866 = vadd.f32 %v779, %v865
        %867 = vmatmul.bf16.gmra.mxu0 %v759
        %v868 = vpop.f32.mrf.mxu0
        %v869 = vadd.f32 %v779, %v868
        %v870 = vpop.f32.mrf.mxu0
        %v871 = vadd.f32 %v779, %v870
        %872 = vmatmul.bf16.gmra.mxu0 %v760
        %v873 = vpop.f32.mrf.mxu0
        %v874 = vadd.f32 %v779, %v873
        %v875 = vpop.f32.mrf.mxu0
        %v876 = vadd.f32 %v779, %v875
        %877 = vdwg.mxu0
        %878 = vst [vmem:[%s348] sm:$0xff] %v839
        %879 = vst [vmem:[%s348 + $0x8] sm:$0xff] %v841
        %880 = vst [vmem:[%s348 + $0x10] sm:$0xff] %v844
        %881 = vst [vmem:[%s348 + $0x18] sm:$0xff] %v846
        %882 = vst [vmem:[%s348 + $0x20] sm:$0xff] %v849
        %883 = vst [vmem:[%s348 + $0x28] sm:$0xff] %v851
        %884 = vst [vmem:[%s348 + $0x30] sm:$0xff] %v854
        %885 = vst [vmem:[%s348 + $0x38] sm:$0xff] %v856
        %886 = vst [vmem:[%s348 + $0x40] sm:$0xff] %v859
        %887 = vst [vmem:[%s348 + $0x48] sm:$0xff] %v861
        %888 = vst [vmem:[%s348 + $0x50] sm:$0xff] %v864
        %889 = vst [vmem:[%s348 + $0x58] sm:$0xff] %v866
        %890 = vst [vmem:[%s348 + $0x60] sm:$0xff] %v869
        %891 = vst [vmem:[%s348 + $0x68] sm:$0xff] %v871
        %892 = vst [vmem:[%s348 + $0x70] sm:$0xff] %v874
        %893 = vst [vmem:[%s348 + $0x78] sm:$0xff] %v876
        %s894 = sand.u32 %s186, 1
        %s895 = scalar_lea.sflag [#allocation4], %s894
        %s896 = sand.u32 %s186, 1
        %s897 = smul.addr %s896, 128
        %s898 = scalar_lea.vmem [#allocation10], %s897
        // Predicated region
        $region65: #{tpu_custom_call.1} parent=47 // pred_check
          %p899 = pneg %p196
        $region66: #{tpu_custom_call.1} parent=47 // pred_check_branch
          %901 = sbr.rel (%p899) target = $region68
        $region67: #{tpu_custom_call.1} parent=47 // pred_region
          %s902 = smul.u32 16, %s26
          %904 = vsyncadd %s895, 0
          %s905 = smul.addr %s902, 8
          %s906 = scalar_lea.hbm %s7, %s905
          %s907 = sshll.u32 %s898, 4
          %s908 = int_to_ptr.vmem [resolvable:$true] %s907
          %s909 = sshll.u32 %s906, 4
          %s910 = int_to_ptr.hbm [resolvable:$true] %s909
          %915 = dma.vmem_to_hbm [thread:$0]  %s908, 2048, %s910, %s895, 128, 128, 8
        $region68: #{tpu_custom_call.1} parent=47 // pred_fallthru
          _
      $region48: #{tpu_custom_call.1} parent=5 // pred_fallthru
        _
      %p916 = scmp.le.s32.totalorder 2, %s21
      // Predicated region
      $region69: #{tpu_custom_call.1} parent=5 // pred_check
        %p917 = pneg %p916
      $region70: #{tpu_custom_call.1} parent=5 // pred_check_branch
        %919 = sbr.rel (%p917) target = $region72
      $region71: #{tpu_custom_call.1} parent=5 // pred_region
        %s920 = ssub.s32 %s21, 2
        // Predicated region
        $region73: #{tpu_custom_call.1} parent=71 // pred_check
          %p921 = pneg %p202
        $region74: #{tpu_custom_call.1} parent=71 // pred_check_branch
          %923 = sbr.rel (%p921) target = $region76
        $region75: #{tpu_custom_call.1} parent=71 // pred_region
          %s924 = sand.u32 %s187, 1
          %s925 = scalar_lea.sflag [#allocation4], %s924
          %s926 = sand.u32 %s187, 1
          %s927 = smul.addr %s926, 128
          %s928 = scalar_lea.vmem [#allocation10], %s927
          %930 = dma.done %s925, 2048
        $region76: #{tpu_custom_call.1} parent=71 // pred_fallthru
          _
      $region72: #{tpu_custom_call.1} parent=5 // pred_fallthru
        _
    $region6: #{tpu_custom_call.1} parent=1 // loop_footer
      %s25 = sadd.s32 1, %s21
    $region7: #{tpu_custom_call.1} parent=1 // loop_footer_branch
      %20 = sbr.rel target = $region3
    $region8: #{tpu_custom_call.1} parent=1 // loop_exit
      _
    %931 = vsyncpa [#allocation3], 1
    %s932 = scalar_lea.sflag [#allocation3], 1
    %933 = vsyncpa %s932, 1
    %934 = vsyncpa [#allocation6], 1
    %935 = vsyncpa [#allocation9], 1
    %936 = vsyncpa [#allocation4], 1
    %s937 = scalar_lea.sflag [#allocation4], 1
    %938 = vsyncpa %s937, 1

</llo_original>
